<compile_context>
chip_gen: v5e
topology: v5e:2x2
jax: 0.10.0
libtpu: 0.0.40
codegen_flags: <defaults>
</compile_context>

<pallas_src>
import functools

import jax
import jax.numpy as jnp
import numpy as np
from jax.experimental import pallas as pl
from jax.experimental.pallas import tpu as pltpu

_LANE = 128
_SUBLANE = 8


def _round_up(a: int, b: int) -> int:
    return (a + b - 1) // b * b


def _batch_dim_semantics():
    """CORE_PARALLEL only changes codegen on multi-TC chips (v7x); elsewhere
    plain "parallel" (measured: parallel vs arbitrary is a no-op on 1-TC)."""
    try:
        kind = jax.devices()[0].device_kind.lower()
    except Exception:  # defensive: never let detection break compilation
        kind = ""
    if "v7" in kind or "7x" in kind:
        return (pltpu.CORE_PARALLEL,)
    return ("parallel",)


def tab_encoder_kernel(x_ref, w1_ref, w2_ref, wt_ref, out_ref):
    """One batch tile: x -> relu -> relu -> fused [z | out_s | out_y] slab."""
    cdt = w1_ref.dtype
    x = x_ref[...].astype(cdt)  # compute-dtype cast in VMEM (no extra HBM pass)

    # enc layer 1: Linear + ReLU (ReLU on the f32 accumulator, then downcast).
    h1 = jnp.dot(x, w1_ref[...], preferred_element_type=jnp.float32)
    h1 = jnp.maximum(h1, 0.0).astype(cdt)

    # enc layer 2: Linear + ReLU.
    h2 = jnp.dot(h1, w2_ref[...], preferred_element_type=jnp.float32)
    h2 = jnp.maximum(h2, 0.0).astype(cdt)

    # Fused tail: [z | out_s | out_y] in one lane-dense matmul + one store.
    tail = jnp.dot(h2, wt_ref[...], preferred_element_type=jnp.float32)
    out_ref[...] = tail.astype(out_ref.dtype)


def prepare_tab_encoder_weights(w1, w2, wfc, ws, wy, *,
                                compute_dtype=jnp.bfloat16):
    """One-time weight preprocessing (hoisted out of the per-call hot path).

    Folds fc + both heads into W_tail = [Wfc | Wfc@Ws | Wfc@Wy] (f32/HIGHEST,
    then a single quantization to compute_dtype) and zero-pads the hidden dim
    to a lane-dense multiple of 128.  Returns ((w1p, w2p, wtp), (z, s, y) dims).
    """
    f32 = jnp.float32
    hi = jax.lax.Precision.HIGHEST
    x_dim, h_dim = w1.shape
    z_dim, s_dim, y_dim = wfc.shape[1], ws.shape[1], wy.shape[1]

    wfs = jnp.dot(wfc.astype(f32), ws.astype(f32), precision=hi)    # [h, s]
    wfy = jnp.dot(wfc.astype(f32), wy.astype(f32), precision=hi)    # [h, y]
    w_tail = jnp.concatenate([wfc.astype(f32), wfs, wfy], axis=1)   # [h, z+s+y]

    h_pad = _round_up(h_dim, _LANE)
    w1p = jnp.zeros((x_dim, h_pad), f32).at[:, :h_dim].set(w1.astype(f32))
    w2p = jnp.zeros((h_pad, h_pad), f32).at[:h_dim, :h_dim].set(w2.astype(f32))
    wtp = jnp.zeros((h_pad, w_tail.shape[1]), f32).at[:h_dim, :].set(w_tail)

    cdt = compute_dtype
    return (w1p.astype(cdt), w2p.astype(cdt), wtp.astype(cdt)), (z_dim, s_dim, y_dim)


@functools.partial(
    jax.jit,
    static_argnames=("z_dim", "s_dim", "y_dim", "block_rows", "out_dtype"))
def tab_encoder_apply(x, w1p, w2p, wtp, *, z_dim, s_dim, y_dim,
                      block_rows: int = 4096, out_dtype=None):
    """Hot path: one fused pallas_call + slab slicing. Returns (out_s, out_y, z)."""
    B, x_dim = x.shape
    h_pad = w1p.shape[1]
    tail_dim = wtp.shape[1]
    assert tail_dim == z_dim + s_dim + y_dim

    o_dtype = x.dtype if out_dtype is None else np.dtype(out_dtype)
    in_itm = np.dtype(x.dtype).itemsize
    cmp_itm = np.dtype(w1p.dtype).itemsize
    out_itm = np.dtype(o_dtype).itemsize

    # --- Batch tile: as large as a conservative cross-generation VMEM budget
    # allows.  Narrow (16 / 28 lane) x and out blocks are lane-padded to 128 in
    # VMEM, so budget with padded widths.
    x_lane = _round_up(x_dim, _LANE)
    tail_lane = _round_up(tail_dim, _LANE)
    per_row = (2 * x_lane * in_itm            # double-buffered x stream
               + 2 * tail_lane * out_itm      # double-buffered output stream
               + 2 * h_pad * (4 + cmp_itm)    # h1/h2 f32 accumulators + downcasts
               + tail_lane * 4)               # tail f32 accumulator
    w_bytes = 2 * cmp_itm * (w1p.size + w2p.size + wtp.size)
    budget = 24 << 20                         # safe on v5e / v6e / v7x (64 MiB phys)
    tb_cap = max(_SUBLANE, ((budget - w_bytes) // per_row) // _SUBLANE * _SUBLANE)
    tb = max(_SUBLANE, min(_round_up(block_rows, _SUBLANE), tb_cap,
                           _round_up(B, _SUBLANE)))
    grid = (pl.cdiv(B, tb),)                  # ragged last block masked by Pallas

    est_vmem = w_bytes + tb * per_row
    vmem_limit = int(min(max(2 * est_vmem, 32 << 20), 56 << 20))

    flops = 2 * B * (x_dim * h_pad + h_pad * h_pad + h_pad * tail_dim)
    bytes_accessed = (B * x_dim * in_itm + B * tail_dim * out_itm
                      + (x_dim + h_pad + tail_dim) * h_pad * cmp_itm)

    slab = pl.pallas_call(
        tab_encoder_kernel,
        out_shape=jax.ShapeDtypeStruct((B, tail_dim), o_dtype),
        grid=grid,
        in_specs=[
            pl.BlockSpec((tb, x_dim), lambda i: (i, 0)),        # x streams
            pl.BlockSpec((x_dim, h_pad), lambda i: (0, 0)),     # weights resident
            pl.BlockSpec((h_pad, h_pad), lambda i: (0, 0)),
            pl.BlockSpec((h_pad, tail_dim), lambda i: (0, 0)),
        ],
        out_specs=pl.BlockSpec((tb, tail_dim), lambda i: (i, 0)),  # one dense slab
        compiler_params=pltpu.CompilerParams(
            dimension_semantics=_batch_dim_semantics(),            # v7x: 2 TCs
            vmem_limit_bytes=vmem_limit,
        ),
        cost_estimate=pl.CostEstimate(
            flops=flops, transcendentals=0, bytes_accessed=bytes_accessed),
    )(x, w1p, w2p, wtp)

    z = slab[:, :z_dim]
    out_s = slab[:, z_dim:z_dim + s_dim]
    out_y = slab[:, z_dim + s_dim:]
    return out_s, out_y, z


def tab_encoder(x, w1, w2, wfc, ws, wy, *, block_rows: int = 4096,
                compute_dtype=jnp.bfloat16, out_dtype=None):
    """Convenience one-shot wrapper (prep + apply). For repeated calls, hoist
    prepare_tab_encoder_weights() and reuse its outputs."""
    (w1p, w2p, wtp), (z_dim, s_dim, y_dim) = prepare_tab_encoder_weights(
        w1, w2, wfc, ws, wy, compute_dtype=compute_dtype)
    return tab_encoder_apply(x, w1p, w2p, wtp, z_dim=z_dim, s_dim=s_dim,
                             y_dim=y_dim, block_rows=block_rows,
                             out_dtype=out_dtype)


def init_linear(key, in_dim, out_dim):
    # Deterministic synthetic init (PyTorch-style uniform bound), stored as
    # [in_dim, out_dim] so the kernel computes x @ W directly.
    bound = 1.0 / jnp.sqrt(jnp.float32(in_dim))
    return jax.random.uniform(key, (in_dim, out_dim), jnp.float32,
                              minval=-bound, maxval=bound)


def _reference(x, w1, w2, wfc, ws, wy):
    hi = jax.lax.Precision.HIGHEST
    h1 = jnp.maximum(jnp.dot(x, w1, precision=hi), 0.0)
    h2 = jnp.maximum(jnp.dot(h1, w2, precision=hi), 0.0)
    z = jnp.dot(h2, wfc, precision=hi)
    return jnp.dot(z, ws, precision=hi), jnp.dot(z, wy, precision=hi), z


if __name__ == "__main__":
    # Small shapes consistent with the module's forward.
    B, x_dim, h_dim, z_dim, s_dim, y_dim = 8, 16, 32, 16, 8, 4

    key = jax.random.PRNGKey(0)
    kx, k1, k2, k3, k4, k5, kx2 = jax.random.split(key, 7)

    x = jax.random.normal(kx, (B, x_dim), jnp.float32)
    w1 = init_linear(k1, x_dim, h_dim)     # enc layer 1
    w2 = init_linear(k2, h_dim, h_dim)     # enc layer 2
    wfc = init_linear(k3, h_dim, z_dim)    # fc
    ws = init_linear(k4, z_dim, s_dim)     # linear_s
    wy = init_linear(k5, z_dim, y_dim)     # linear_y

    # Weights prepared ONCE (f32 compute path), reused across calls below.
    (w1p_f32, w2p_f32, wtp_f32), (zd, sd, yd) = prepare_tab_encoder_weights(
        w1, w2, wfc, ws, wy, compute_dtype=jnp.float32)

    # --- f32 path, single tile ---
    out_s, out_y, z = tab_encoder_apply(x, w1p_f32, w2p_f32, wtp_f32,
                                        z_dim=zd, s_dim=sd, y_dim=yd)
    jax.block_until_ready((out_s, out_y, z))

    s_ref, y_ref, z_ref = _reference(x, w1, w2, wfc, ws, wy)
    assert jnp.allclose(z, z_ref, atol=1e-4, rtol=1e-4)
    assert jnp.allclose(out_s, s_ref, atol=1e-4, rtol=1e-4)
    assert jnp.allclose(out_y, y_ref, atol=1e-4, rtol=1e-4)

    # --- larger, non-divisible batch: multi-step grid with a ragged last block
    #     (no wrapper-side jnp.pad / astype copies over x) ---
    B2 = 500
    x2 = jax.random.normal(kx2, (B2, x_dim), jnp.float32)
    out_s2, out_y2, z2 = tab_encoder_apply(x2, w1p_f32, w2p_f32, wtp_f32,
                                           z_dim=zd, s_dim=sd, y_dim=yd,
                                           block_rows=128)
    jax.block_until_ready((out_s2, out_y2, z2))
    s_ref2, y_ref2, z_ref2 = _reference(x2, w1, w2, wfc, ws, wy)
    assert jnp.allclose(z2, z_ref2, atol=1e-4, rtol=1e-4)
    assert jnp.allclose(out_s2, s_ref2, atol=1e-4, rtol=1e-4)
    assert jnp.allclose(out_y2, y_ref2, atol=1e-4, rtol=1e-4)

    # --- bf16 compute / bf16 output path (default compute dtype; f32 MXU accum
    #     and f32-accumulator ReLU preserved inside the kernel) ---
    (w1p_bf, w2p_bf, wtp_bf), _ = prepare_tab_encoder_weights(
        w1, w2, wfc, ws, wy, compute_dtype=jnp.bfloat16)
    out_s3, out_y3, z3 = tab_encoder_apply(x2, w1p_bf, w2p_bf, wtp_bf,
                                           z_dim=zd, s_dim=sd, y_dim=yd,
                                           block_rows=4096,
                                           out_dtype=jnp.bfloat16)
    jax.block_until_ready((out_s3, out_y3, z3))
    assert jnp.allclose(z3.astype(jnp.float32), z_ref2, atol=5e-2, rtol=5e-2)
    assert jnp.allclose(out_s3.astype(jnp.float32), s_ref2, atol=5e-2, rtol=5e-2)
    assert jnp.allclose(out_y3.astype(jnp.float32), y_ref2, atol=5e-2, rtol=5e-2)

    # --- one-shot convenience wrapper smoke test (default bf16 compute) ---
    out_s4, out_y4, z4 = tab_encoder(x, w1, w2, wfc, ws, wy)
    jax.block_until_ready((out_s4, out_y4, z4))
    assert jnp.allclose(z4, z_ref, atol=5e-2, rtol=5e-2)

    print("KERNEL_OK")
</pallas_src>

<mosaic_0001>
module attributes {stable_mosaic.version = 11 : i64} {
  func.func @tab_encoder_kernel(%arg0: i32, %arg1: memref<8x16xf32, #tpu.memory_space<vmem>>, %arg2: memref<16x128xf32, #tpu.memory_space<vmem>>, %arg3: memref<128x128xf32, #tpu.memory_space<vmem>>, %arg4: memref<128x28xf32, #tpu.memory_space<vmem>>, %arg5: memref<8x28xf32, #tpu.memory_space<vmem>>) attributes {dimension_semantics = [#tpu.dimension_semantics<parallel>], iteration_bounds = array<i64: 1>, scalar_prefetch = 0 : i64, scratch_operands = 0 : i64, tpu.core_type = #tpu.core_type<tc>, window_params = [{transform_indices = @transform_0, window_bounds = array<i64: 8, 16>}, {pipeline_mode = #tpu.pipeline_mode<synchronous>, transform_indices = @transform_1, window_bounds = array<i64: 16, 128>}, {pipeline_mode = #tpu.pipeline_mode<synchronous>, transform_indices = @transform_2, window_bounds = array<i64: 128, 128>}, {pipeline_mode = #tpu.pipeline_mode<synchronous>, transform_indices = @transform_3, window_bounds = array<i64: 128, 28>}, {transform_indices = @transform_4, window_bounds = array<i64: 8, 28>}]} {
    %c0 = arith.constant 0 : index
    %c0_0 = arith.constant 0 : index
    %0 = vector.load %arg1[%c0, %c0_0] : memref<8x16xf32, #tpu.memory_space<vmem>>, vector<8x16xf32>
    %c0_1 = arith.constant 0 : index
    %c0_2 = arith.constant 0 : index
    %1 = vector.load %arg2[%c0_1, %c0_2] : memref<16x128xf32, #tpu.memory_space<vmem>>, vector<16x128xf32>
    %cst = arith.constant dense<0.000000e+00> : vector<8x128xf32>
    %2 = tpu.matmul %0, %1, %cst {dimension_numbers = #tpu.dot_dimension_numbers<[1], [0], [0], [1], [0, 0, 1, 1], [], []>} : vector<8x16xf32>, vector<16x128xf32>, vector<8x128xf32> -> vector<8x128xf32>
    %cst_3 = arith.constant 0.000000e+00 : f32
    %3 = vector.broadcast %cst_3 : f32 to vector<8x128xf32>
    %4 = arith.maximumf %2, %3 : vector<8x128xf32>
    %c0_4 = arith.constant 0 : index
    %c0_5 = arith.constant 0 : index
    %5 = vector.load %arg3[%c0_4, %c0_5] : memref<128x128xf32, #tpu.memory_space<vmem>>, vector<128x128xf32>
    %cst_6 = arith.constant dense<0.000000e+00> : vector<8x128xf32>
    %6 = tpu.matmul %4, %5, %cst_6 {dimension_numbers = #tpu.dot_dimension_numbers<[1], [0], [0], [1], [0, 0, 1, 1], [], []>} : vector<8x128xf32>, vector<128x128xf32>, vector<8x128xf32> -> vector<8x128xf32>
    %cst_7 = arith.constant 0.000000e+00 : f32
    %7 = vector.broadcast %cst_7 : f32 to vector<8x128xf32>
    %8 = arith.maximumf %6, %7 : vector<8x128xf32>
    %c0_8 = arith.constant 0 : index
    %c0_9 = arith.constant 0 : index
    %9 = vector.load %arg4[%c0_8, %c0_9] : memref<128x28xf32, #tpu.memory_space<vmem>>, vector<128x28xf32>
    %cst_10 = arith.constant dense<0.000000e+00> : vector<8x28xf32>
    %10 = tpu.matmul %8, %9, %cst_10 {dimension_numbers = #tpu.dot_dimension_numbers<[1], [0], [0], [1], [0, 0, 1, 1], [], []>} : vector<8x128xf32>, vector<128x28xf32>, vector<8x28xf32> -> vector<8x28xf32>
    %c0_11 = arith.constant 0 : index
    %c0_12 = arith.constant 0 : index
    %11 = vector.load %arg5[%c0_11, %c0_12] : memref<8x28xf32, #tpu.memory_space<vmem>>, vector<8x28xf32>
    tpu.vector_store %arg5[%c0_11, %c0_12], %10 {strides = array<i32>} : memref<8x28xf32, #tpu.memory_space<vmem>>, vector<8x28xf32>,
    return
  }
  func.func @transform_0(%arg0: i32) -> (i32, i32) {
    %c0_i32 = arith.constant 0 : i32
    %c0_i32_0 = arith.constant 0 : i32
    return %arg0, %c0_i32 : i32, i32
  }
  func.func @transform_1(%arg0: i32) -> (i32, i32) {
    %c0_i32 = arith.constant 0 : i32
    %c0_i32_0 = arith.constant 0 : i32
    %c0_i32_1 = arith.constant 0 : i32
    return %c0_i32, %c0_i32_0 : i32, i32
  }
  func.func @transform_2(%arg0: i32) -> (i32, i32) {
    %c0_i32 = arith.constant 0 : i32
    %c0_i32_0 = arith.constant 0 : i32
    %c0_i32_1 = arith.constant 0 : i32
    return %c0_i32, %c0_i32_0 : i32, i32
  }
  func.func @transform_3(%arg0: i32) -> (i32, i32) {
    %c0_i32 = arith.constant 0 : i32
    %c0_i32_0 = arith.constant 0 : i32
    %c0_i32_1 = arith.constant 0 : i32
    return %c0_i32, %c0_i32_0 : i32, i32
  }
  func.func @transform_4(%arg0: i32) -> (i32, i32) {
    %c0_i32 = arith.constant 0 : i32
    %c0_i32_0 = arith.constant 0 : i32
    return %arg0, %c0_i32 : i32, i32
  }
}

</mosaic_0001>

<llo_original>
// kernel: tab_encoder_apply.1
$region0: #{tab_encoder_apply.1}
  #allocation0 [shape = 'u32[]', space=smem, size = 0x4, offset = 0x4, fixed_abs, tag = 'smem constant byte address 0x4 - core index']
  #allocation1 [shape = 'u32[72,128]{1,0:T(1,128)}', space=vmem, size = 0x9000, scoped, tag = 'internal scratch']
  %s0 = inlined_call_operand.vmem [shape: f32[8,16], index: 0, kind: input, shape index: {}]
  %s1 = inlined_call_operand.vmem [shape: f32[16,128], index: 1, kind: input, shape index: {}]
  %s2 = inlined_call_operand.vmem [shape: f32[128,128], index: 2, kind: input, shape index: {}]
  %s3 = inlined_call_operand.vmem [shape: f32[128,28], index: 3, kind: input, shape index: {}]
  %s4 = inlined_call_operand.vmem [shape: f32[8,28], index: 4, kind: output, shape index: {}]
  %s5 = sld [smem:[#allocation0]]
  $region26: #{tab_encoder_apply.1} parent=0
    _
  %s7 = ssub.s32 1, %s5
  %s8 = scalar_select 0, %s7, %s5
  // Predicated region
  $region2: #{tab_encoder_apply.1} parent=0 // pred_check
    _
  $region3: #{tab_encoder_apply.1} parent=0 // pred_check_branch
    %10 = sbr.rel (0) target = $region5
  $region4: #{tab_encoder_apply.1} parent=0 // pred_region
    _
  $region5: #{tab_encoder_apply.1} parent=0 // pred_fallthru
    _
  // Predicated region
  $region6: #{tab_encoder_apply.1} parent=0 // pred_check
    _
  $region7: #{tab_encoder_apply.1} parent=0 // pred_check_branch
    %12 = sbr.rel (0) target = $region9
  $region8: #{tab_encoder_apply.1} parent=0 // pred_region
    _
  $region9: #{tab_encoder_apply.1} parent=0 // pred_fallthru
    _
  // Predicated region
  $region10: #{tab_encoder_apply.1} parent=0 // pred_check
    _
  $region11: #{tab_encoder_apply.1} parent=0 // pred_check_branch
    %14 = sbr.rel (0) target = $region13
  $region12: #{tab_encoder_apply.1} parent=0 // pred_region
    _
  $region13: #{tab_encoder_apply.1} parent=0 // pred_fallthru
    _
  // Predicated region
  $region14: #{tab_encoder_apply.1} parent=0 // pred_check
    _
  $region15: #{tab_encoder_apply.1} parent=0 // pred_check_branch
    %16 = sbr.rel (0) target = $region17
  $region16: #{tab_encoder_apply.1} parent=0 // pred_region
    _
  $region17: #{tab_encoder_apply.1} parent=0 // pred_fallthru
    _
  %v17 = vld [vmem:[%s0] sm:$0xff]
  %v18 = vld [vmem:[%s1] sm:$0xff]
  %v19 = vld [vmem:[%s1 + $0x8] sm:$0xff]
  %vm20 = vcmask 130048
  %v22 = vsel %vm20, %v17, 0
  %24 = vmatpush.msra.mxu0 0.0
  %25 = vmatpush.msra.mxu0 0.0
  %26 = vmatpush.msra.mxu0 0.0
  %27 = vmatpush.msra.mxu0 0.0
  %28 = vmatpush.msra.mxu0 0.0
  %29 = vmatpush.msra.mxu0 0.0
  %30 = vmatpush.msra.mxu0 0.0
  %31 = vmatpush.msra.mxu0 0.0
  %32 = vmatpush.msra.mxu0 0.0
  %33 = vmatpush.msra.mxu0 0.0
  %34 = vmatpush.msra.mxu0 0.0
  %35 = vmatpush.msra.mxu0 0.0
  %36 = vmatpush.msra.mxu0 0.0
  %37 = vmatpush.msra.mxu0 0.0
  %38 = vmatpush.msra.mxu0 %v19
  %39 = vmatpush.msra.mxu0 %v18
  %40 = vmatmul.f32.gmra.mxu0 %v22
  %v41 = vpop.f32.mrf.mxu0
  %v42 = vadd.f32 0.0, %v41
  %43 = vdwg.mxu0
  %v44 = vmax.f32 %v42, 0.0
  %v45 = vld [vmem:[%s2] sm:$0xff]
  %v46 = vld [vmem:[%s2 + $0x8] sm:$0xff]
  %v47 = vld [vmem:[%s2 + $0x10] sm:$0xff]
  %v48 = vld [vmem:[%s2 + $0x18] sm:$0xff]
  %v49 = vld [vmem:[%s2 + $0x20] sm:$0xff]
  %v50 = vld [vmem:[%s2 + $0x28] sm:$0xff]
  %v51 = vld [vmem:[%s2 + $0x30] sm:$0xff]
  %v52 = vld [vmem:[%s2 + $0x38] sm:$0xff]
  %v53 = vld [vmem:[%s2 + $0x40] sm:$0xff]
  %v54 = vld [vmem:[%s2 + $0x48] sm:$0xff]
  %v55 = vld [vmem:[%s2 + $0x50] sm:$0xff]
  %v56 = vld [vmem:[%s2 + $0x58] sm:$0xff]
  %v57 = vld [vmem:[%s2 + $0x60] sm:$0xff]
  %v58 = vld [vmem:[%s2 + $0x68] sm:$0xff]
  %v59 = vld [vmem:[%s2 + $0x70] sm:$0xff]
  %v60 = vld [vmem:[%s2 + $0x78] sm:$0xff]
  %61 = vmatpush.msra.mxu0 %v60
  %62 = vmatpush.msra.mxu0 %v59
  %63 = vmatpush.msra.mxu0 %v58
  %64 = vmatpush.msra.mxu0 %v57
  %65 = vmatpush.msra.mxu0 %v56
  %66 = vmatpush.msra.mxu0 %v55
  %67 = vmatpush.msra.mxu0 %v54
  %68 = vmatpush.msra.mxu0 %v53
  %69 = vmatpush.msra.mxu0 %v52
  %70 = vmatpush.msra.mxu0 %v51
  %71 = vmatpush.msra.mxu0 %v50
  %72 = vmatpush.msra.mxu0 %v49
  %73 = vmatpush.msra.mxu0 %v48
  %74 = vmatpush.msra.mxu0 %v47
  %75 = vmatpush.msra.mxu0 %v46
  %76 = vmatpush.msra.mxu0 %v45
  %77 = vmatmul.f32.gmra.mxu0 %v44
  %v78 = vpop.f32.mrf.mxu0
  %v79 = vadd.f32 0.0, %v78
  %80 = vdwg.mxu0
  %v81 = vmax.f32 %v79, 0.0
  %v82 = vld [vmem:[%s3] sm:$0xff]
  %v83 = vld [vmem:[%s3 + $0x8] sm:$0xff]
  %v84 = vld [vmem:[%s3 + $0x10] sm:$0xff]
  %v85 = vld [vmem:[%s3 + $0x18] sm:$0xff]
  %v86 = vld [vmem:[%s3 + $0x20] sm:$0xff]
  %v87 = vld [vmem:[%s3 + $0x28] sm:$0xff]
  %v88 = vld [vmem:[%s3 + $0x30] sm:$0xff]
  %v89 = vld [vmem:[%s3 + $0x38] sm:$0xff]
  %v90 = vld [vmem:[%s3 + $0x40] sm:$0xff]
  %v91 = vld [vmem:[%s3 + $0x48] sm:$0xff]
  %v92 = vld [vmem:[%s3 + $0x50] sm:$0xff]
  %v93 = vld [vmem:[%s3 + $0x58] sm:$0xff]
  %v94 = vld [vmem:[%s3 + $0x60] sm:$0xff]
  %v95 = vld [vmem:[%s3 + $0x68] sm:$0xff]
  %v96 = vld [vmem:[%s3 + $0x70] sm:$0xff]
  %v97 = vld [vmem:[%s3 + $0x78] sm:$0xff]
  %98 = vmatpush.msra.mxu0 %v97
  %99 = vmatpush.msra.mxu0 %v96
  %100 = vmatpush.msra.mxu0 %v95
  %101 = vmatpush.msra.mxu0 %v94
  %102 = vmatpush.msra.mxu0 %v93
  %103 = vmatpush.msra.mxu0 %v92
  %104 = vmatpush.msra.mxu0 %v91
  %105 = vmatpush.msra.mxu0 %v90
  %106 = vmatpush.msra.mxu0 %v89
  %107 = vmatpush.msra.mxu0 %v88
  %108 = vmatpush.msra.mxu0 %v87
  %109 = vmatpush.msra.mxu0 %v86
  %110 = vmatpush.msra.mxu0 %v85
  %111 = vmatpush.msra.mxu0 %v84
  %112 = vmatpush.msra.mxu0 %v83
  %113 = vmatpush.msra.mxu0 %v82
  %114 = vmatmul.f32.gmra.mxu0 %v81
  %v115 = vpop.f32.mrf.mxu0
  %v116 = vadd.f32 0.0, %v115
  %117 = vdwg.mxu0
  %vm118 = vcmask 228352
  %119 = vst.msk [vmem:[%s4] sm:$0xff] %vm118, %v116
  // Predicated region
  $region18: #{tab_encoder_apply.1} parent=0 // pred_check
    _
  $region19: #{tab_encoder_apply.1} parent=0 // pred_check_branch
    %121 = sbr.rel (0) target = $region21
  $region20: #{tab_encoder_apply.1} parent=0 // pred_region
    _
  $region21: #{tab_encoder_apply.1} parent=0 // pred_fallthru
    _
  // Predicated region
  $region22: #{tab_encoder_apply.1} parent=0 // pred_check
    _
  $region23: #{tab_encoder_apply.1} parent=0 // pred_check_branch
    %123 = sbr.rel (0) target = $region25
  $region24: #{tab_encoder_apply.1} parent=0 // pred_region
    _
  $region25: #{tab_encoder_apply.1} parent=0 // pred_fallthru
    _

</llo_original>
